<compile_context>
chip_gen: v6e
topology: v6e:2x2x1
jax: 0.10.0
libtpu: 0.0.40
codegen_flags: <defaults>
</compile_context>

<pallas_src>
import functools

import jax
import jax.numpy as jnp
from jax.experimental import pallas as pl
from jax.experimental.pallas import tpu as pltpu


def _round_up(v, m):
    return ((v + m - 1) // m) * m


def _gclstm_kernel(x_ref, h_ref, adj_ref, c_ref, wx_ref, wh_ref, b_ref,
                   h_new_ref, c_new_ref, *, dout, mxu_dtype):
    bB, n, _ = x_ref.shape
    g_cols = wx_ref.shape[-1]                      # 4*Dout rounded up to 128

    # ---- normalized adjacency (self loops, deg clamp, D^-1/2) -- all f32 ----
    row = jax.lax.broadcasted_iota(jnp.int32, (n, n), 0)
    col = jax.lax.broadcasted_iota(jnp.int32, (n, n), 1)
    diag = (row == col)[None]                      # (1, N, N) self-loop mask

    adj = adj_ref[...].astype(jnp.float32)         # (bB, N, N)
    adj_sl = jnp.where(diag, 1.0, adj)             # diag(A) := 1
    deg = jnp.sum(adj_sl, axis=-1, keepdims=True)  # exact f32 row sums
    dinv = jax.lax.rsqrt(jnp.maximum(deg, 1.0))    # (bB, N, 1)

    # ---- fused weight matmul for all 8 GCN linears (gate order [i,f,g,o]) ---
    x2 = x_ref[...].astype(mxu_dtype).reshape(bB * n, -1)
    h2 = h_ref[...].astype(mxu_dtype).reshape(bB * n, -1)
    m = (jnp.dot(x2, wx_ref[...], preferred_element_type=jnp.float32) +
         jnp.dot(h2, wh_ref[...], preferred_element_type=jnp.float32))
    m = m.reshape(bB, n, g_cols)                   # (bB, N, G) f32

    # D^{-1/2} A_sl D^{-1/2} M == dinv * (A_sl @ (dinv * M))   (no transpose).
    am = jnp.einsum('bij,bjk->bik', adj_sl.astype(mxu_dtype),
                    (dinv * m).astype(mxu_dtype),
                    preferred_element_type=jnp.float32)
    pre = dinv * am + b_ref[...]                   # (bB, N, G) f32

    # ---- LSTM state update (only over the live Dout columns) ---------------
    i_g = jax.nn.sigmoid(pre[..., 0 * dout:1 * dout])
    f_g = jax.nn.sigmoid(pre[..., 1 * dout:2 * dout])
    g_g = jnp.tanh(pre[..., 2 * dout:3 * dout])
    o_g = jax.nn.sigmoid(pre[..., 3 * dout:4 * dout])

    c_new = f_g * c_ref[...] + i_g * g_g
    h_new = o_g * jnp.tanh(c_new)

    h_new_ref[...] = h_new.astype(h_new_ref.dtype)
    c_new_ref[...] = c_new.astype(c_new_ref.dtype)


def _tpu_info():
    """Returns (usable VMEM limit in bytes, True if a 2-TensorCore chip)."""
    try:
        kind = jax.devices()[0].device_kind.lower()
    except Exception:
        kind = ""
    two_tc = "v7" in kind
    try:
        vmem_cap = int(pltpu.get_tpu_info().vmem_capacity_bytes)
    except Exception:
        vmem_cap = 64 * 1024 * 1024                # conservative fallback
    if two_tc:
        vmem_cap = min(vmem_cap, 64 * 1024 * 1024)  # per-TC VMEM on v7x
    vmem_limit = min(int(vmem_cap * 0.70), 96 * 1024 * 1024)
    return vmem_limit, two_tc


def _pick_batch_block(B, Np, Din, Dh, Dout, G, isz_x, isz_h, isz_a,
                      vmem_limit, two_tc):
    """Largest batch block whose (over-estimated) VMEM footprint fits; reserve
    >= 2 grid steps only on 2-TC chips (megacore sharding)."""
    per_graph = (
        # double-buffered pipelined I/O blocks
        2 * (Np * Din * isz_x + Np * Dh * isz_h + Np * Np * isz_a
             + Np * Dout * 4 + Np * Dout * (2 + 4))
        # in-kernel temporaries: adj f32 view + adj_sl f32 + adj_sl bf16,
        # bf16 x/h copies, m / dinv*m / am / pre f32, bf16 messages, gates/state
        + Np * Np * (4 + 4 + 2)
        + Np * (Din + Dh) * 2
        + 4 * Np * G * 4 + Np * G * 2
        + 8 * Np * Dout * 4)
    resident = 2 * ((Din + Dh) * G * 2 + G * 4)     # weights + bias (dbl-buffered)
    budget = int(vmem_limit * 0.8) - resident
    bb = max(1, min(B, budget // max(per_graph, 1)))
    if two_tc:
        bb = min(bb, max(1, B // 2))                # leave >=2 steps for megacore
    while B % bb:
        bb -= 1
    return bb


@functools.partial(jax.jit, static_argnames=("use_bf16_mxu",))
def gclstm_cell(x, adj, hidden_state, cell_state, wx, wh, bias, *,
                use_bf16_mxu=True):
    """x:(B,N,Din) adj:(B,N,N) (any float dtype; cast to bf16 once outside a
    recurrent loop for best HBM traffic) hidden:(B,N,Dh) cell:(B,N,Dout)
    wx:(Din,4*Dout) wh:(Dh,4*Dout) bias:(1,4*Dout), gate order [i,f,g,o].
    Returns (h_new bf16, c_new f32), each (B,N,Dout)."""
    B, N, Din = x.shape
    Dh = hidden_state.shape[-1]
    Dout = cell_state.shape[-1]
    G = _round_up(4 * Dout, 128)                   # one lane-dense 4-gate block
    mxu_dtype = jnp.bfloat16 if use_bf16_mxu else jnp.float32

    # Pad the node axis to the bf16 sublane tile so the in-kernel
    # (bB, N, .) -> (bB*N, .) reshapes are layout preserving. (For a T-step
    # recurrence, pad adj once outside the scan, not per step.)
    Np = N if N % 16 == 0 else _round_up(N, 16)
    if Np != N:
        pad = Np - N
        x = jnp.pad(x, ((0, 0), (0, pad), (0, 0)))
        hidden_state = jnp.pad(hidden_state, ((0, 0), (0, pad), (0, 0)))
        cell_state = jnp.pad(cell_state, ((0, 0), (0, pad), (0, 0)))
        adj = jnp.pad(adj, ((0, 0), (0, pad), (0, pad)))

    cell_state = cell_state.astype(jnp.float32)

    # Fused + padded parameters (zero padding keeps dead G-4*Dout columns inert).
    wx_p = jnp.pad(wx, ((0, 0), (0, G - 4 * Dout))).astype(mxu_dtype)
    wh_p = jnp.pad(wh, ((0, 0), (0, G - 4 * Dout))).astype(mxu_dtype)
    b_p = jnp.pad(bias, ((0, 0), (0, G - 4 * Dout))).astype(jnp.float32)

    vmem_limit, two_tc = _tpu_info()
    bB = _pick_batch_block(B, Np, Din, Dh, Dout, G,
                           x.dtype.itemsize, hidden_state.dtype.itemsize,
                           adj.dtype.itemsize, vmem_limit, two_tc)
    grid = (B // bB,)

    def batched(d):
        return pl.BlockSpec((bB, Np, d), lambda bi: (bi, 0, 0))

    def resident(shape2):
        return pl.BlockSpec(shape2, lambda bi: (0, 0))

    cost = pl.CostEstimate(
        flops=2 * B * Np * Np * G + 2 * B * Np * (Din + Dh) * G,
        transcendentals=B * Np * (5 * Dout + 1),
        bytes_accessed=(x.size * x.dtype.itemsize
                        + hidden_state.size * hidden_state.dtype.itemsize
                        + adj.size * adj.dtype.itemsize
                        + cell_state.size * 4
                        + (Din + Dh) * G * 2 + G * 4
                        + B * Np * Dout * (2 + 4)))

    # TODO(synk): add a column-tiled reduction grid axis over the adjacency
    # contraction for graphs where 2*bB*N*N bf16 exceeds ~1/3 of the VMEM limit
    # (only relevant for N >~ 1.5-2K on v7x); not needed at these shapes.
    h_new, c_new = pl.pallas_call(
        functools.partial(_gclstm_kernel, dout=Dout, mxu_dtype=mxu_dtype),
        grid=grid,
        in_specs=[
            batched(Din),            # x
            batched(Dh),             # hidden state
            batched(Np),             # adjacency (consumed in caller dtype)
            batched(Dout),           # cell state (aliased to c_new output)
            resident((Din, G)),      # x-side fused gate weights
            resident((Dh, G)),       # h-side fused gate weights
            resident((1, G)),        # fused bias
        ],
        out_specs=(batched(Dout), batched(Dout)),
        out_shape=(jax.ShapeDtypeStruct((B, Np, Dout), jnp.bfloat16),
                   jax.ShapeDtypeStruct((B, Np, Dout), jnp.float32)),
        input_output_aliases={3: 1},                 # reuse cell buffer for c_new
        compiler_params=pltpu.CompilerParams(
            dimension_semantics=("parallel",),
            vmem_limit_bytes=vmem_limit),
        cost_estimate=cost,
    )(x, hidden_state, adj, cell_state, wx_p, wh_p, b_p)

    if Np != N:
        h_new = h_new[:, :N, :]
        c_new = c_new[:, :N, :]
    return h_new, c_new


def _reference(x, adj, h, c, wx, wh, bias):
    """Pure-JAX f32 reference implementing the same math (sanity check)."""
    B, N, _ = adj.shape
    eye = jnp.eye(N, dtype=adj.dtype)
    adj = jnp.where(eye[None] > 0, 1.0, adj)
    deg = jnp.maximum(adj.sum(-1), 1.0)
    dinv = deg ** -0.5
    adj_n = dinv[..., :, None] * adj * dinv[..., None, :]
    pre = jnp.einsum('bij,bjk->bik', adj_n,
                     jnp.einsum('bnd,dk->bnk', x, wx) +
                     jnp.einsum('bnh,hk->bnk', h, wh)) + bias
    Dout = c.shape[-1]
    i = jax.nn.sigmoid(pre[..., 0 * Dout:1 * Dout])
    f = jax.nn.sigmoid(pre[..., 1 * Dout:2 * Dout])
    g = jnp.tanh(pre[..., 2 * Dout:3 * Dout])
    o = jax.nn.sigmoid(pre[..., 3 * Dout:4 * Dout])
    c_new = f * c + i * g
    return o * jnp.tanh(c_new), c_new


if __name__ == "__main__":
    B, N = 2, 16
    input_dim, hidden_dim, output_dim = 4, 8, 8   # hidden_dim == output_dim (LSTM recurrence)

    key = jax.random.PRNGKey(0)
    ks = jax.random.split(key, 8)

    x = jax.random.normal(ks[0], (B, N, input_dim), jnp.float32)
    adj = (jax.random.uniform(ks[1], (B, N, N)) > 0.5).astype(jnp.float32)
    adj = jnp.maximum(adj, jnp.swapaxes(adj, -1, -2))          # symmetric 0/1 adjacency
    hidden_state = jax.random.normal(ks[2], (B, N, hidden_dim), jnp.float32)
    cell_state = jax.random.normal(ks[3], (B, N, output_dim), jnp.float32)

    # Deterministic synthetic parameters. Gate order along stacked axis: [i, f, g, o].
    # wx stacks the four x-side GCN weights, wh the four h-side ones; bias = bias_x + bias_h.
    wx = 0.3 * jax.random.normal(ks[4], (input_dim, 4 * output_dim), jnp.float32)
    wh = 0.3 * jax.random.normal(ks[5], (hidden_dim, 4 * output_dim), jnp.float32)
    bias = (0.1 * jax.random.normal(ks[6], (1, 4 * output_dim), jnp.float32)
            + 0.1 * jax.random.normal(ks[7], (1, 4 * output_dim), jnp.float32))

    # Cast the adjacency to bf16 ONCE (outside any recurrent loop); the kernel
    # consumes it directly -- no per-step cast pass over the (B,N,N) stream.
    adj_bf16 = adj.astype(jnp.bfloat16)

    h_new, c_new = gclstm_cell(x, adj_bf16, hidden_state, cell_state,
                               wx, wh, bias, use_bf16_mxu=True)
    jax.block_until_ready((h_new, c_new))

    h_ref, c_ref = _reference(x, adj, hidden_state, cell_state, wx, wh, bias)
    # bf16 MXU operands (f32 accumulation) + bf16 h_new output -> relaxed
    # tolerance versus the all-f32 reference.
    assert jnp.allclose(h_new.astype(jnp.float32), h_ref, atol=3e-2, rtol=3e-2)
    assert jnp.allclose(c_new, c_ref, atol=3e-2, rtol=3e-2)

    print("KERNEL_OK")
</pallas_src>

<mosaic_0001>
module attributes {stable_mosaic.version = 11 : i64} {
  func.func @_gclstm_kernel(%arg0: i32, %arg1: memref<2x16x4xf32, #tpu.memory_space<vmem>>, %arg2: memref<2x16x8xf32, #tpu.memory_space<vmem>>, %arg3: memref<2x16x16xbf16, #tpu.memory_space<vmem>>, %arg4: memref<2x16x8xf32, #tpu.memory_space<vmem>>, %arg5: memref<4x128xbf16, #tpu.memory_space<vmem>>, %arg6: memref<8x128xbf16, #tpu.memory_space<vmem>>, %arg7: memref<1x128xf32, #tpu.memory_space<vmem>>, %arg8: memref<2x16x8xbf16, #tpu.memory_space<vmem>>, %arg9: memref<2x16x8xf32, #tpu.memory_space<vmem>>) attributes {dimension_semantics = [#tpu.dimension_semantics<parallel>], iteration_bounds = array<i64: 1>, scalar_prefetch = 0 : i64, scratch_operands = 0 : i64, tpu.core_type = #tpu.core_type<tc>, window_params = [{transform_indices = @transform_0, window_bounds = array<i64: 2, 16, 4>}, {transform_indices = @transform_1, window_bounds = array<i64: 2, 16, 8>}, {transform_indices = @transform_2, window_bounds = array<i64: 2, 16, 16>}, {transform_indices = @transform_3, window_bounds = array<i64: 2, 16, 8>}, {pipeline_mode = #tpu.pipeline_mode<synchronous>, transform_indices = @transform_4, window_bounds = array<i64: 4, 128>}, {pipeline_mode = #tpu.pipeline_mode<synchronous>, transform_indices = @transform_5, window_bounds = array<i64: 8, 128>}, {pipeline_mode = #tpu.pipeline_mode<synchronous>, transform_indices = @transform_6, window_bounds = array<i64: 1, 128>}, {transform_indices = @transform_7, window_bounds = array<i64: 2, 16, 8>}, {transform_indices = @transform_8, window_bounds = array<i64: 2, 16, 8>}]} {
    %0 = tpu.iota {dimensions = array<i32: 0>} : vector<16x16xi32>
    %1 = tpu.iota {dimensions = array<i32: 1>} : vector<16x16xi32>
    %2 = arith.cmpi eq, %0, %1 : vector<16x16xi32>
    %3 = vector.shape_cast %2 : vector<16x16xi1> to vector<1x16x16xi1>
    %c0 = arith.constant 0 : index
    %c0_0 = arith.constant 0 : index
    %c0_1 = arith.constant 0 : index
    %4 = vector.load %arg3[%c0, %c0_0, %c0_1] : memref<2x16x16xbf16, #tpu.memory_space<vmem>>, vector<2x16x16xbf16>
    %5 = arith.extf %4 : vector<2x16x16xbf16> to vector<2x16x16xf32>
    %cst = arith.constant 1.000000e+00 : f32
    %6 = vector.shape_cast %3 : vector<1x16x16xi1> to vector<1x16x16xi1>
    %7 = vector.broadcast %6 : vector<1x16x16xi1> to vector<2x16x16xi1>
    %8 = vector.broadcast %cst : f32 to vector<2x16x16xf32>
    %9 = arith.select %7, %8, %5 : vector<2x16x16xi1>, vector<2x16x16xf32>
    %cst_2 = arith.constant dense<0.000000e+00> : vector<2x16xf32>
    %10 = vector.multi_reduction <add>, %9, %cst_2 [2] : vector<2x16x16xf32> to vector<2x16xf32>
    %11 = vector.shape_cast %10 : vector<2x16xf32> to vector<2x16x1xf32>
    %cst_3 = arith.constant 1.000000e+00 : f32
    %12 = vector.broadcast %cst_3 : f32 to vector<2x16x1xf32>
    %13 = arith.maximumf %11, %12 : vector<2x16x1xf32>
    %14 = math.rsqrt %13 : vector<2x16x1xf32>
    %c0_4 = arith.constant 0 : index
    %c0_5 = arith.constant 0 : index
    %c0_6 = arith.constant 0 : index
    %15 = vector.load %arg1[%c0_4, %c0_5, %c0_6] : memref<2x16x4xf32, #tpu.memory_space<vmem>>, vector<2x16x4xf32>
    %16 = arith.truncf %15 : vector<2x16x4xf32> to vector<2x16x4xbf16>
    %17 = vector.shape_cast %16 : vector<2x16x4xbf16> to vector<32x4xbf16>
    %c0_7 = arith.constant 0 : index
    %c0_8 = arith.constant 0 : index
    %c0_9 = arith.constant 0 : index
    %18 = vector.load %arg2[%c0_7, %c0_8, %c0_9] : memref<2x16x8xf32, #tpu.memory_space<vmem>>, vector<2x16x8xf32>
    %19 = arith.truncf %18 : vector<2x16x8xf32> to vector<2x16x8xbf16>
    %20 = vector.shape_cast %19 : vector<2x16x8xbf16> to vector<32x8xbf16>
    %c0_10 = arith.constant 0 : index
    %c0_11 = arith.constant 0 : index
    %21 = vector.load %arg5[%c0_10, %c0_11] : memref<4x128xbf16, #tpu.memory_space<vmem>>, vector<4x128xbf16>
    %cst_12 = arith.constant dense<0.000000e+00> : vector<32x128xf32>
    %22 = tpu.matmul %17, %21, %cst_12 {dimension_numbers = #tpu.dot_dimension_numbers<[1], [0], [0], [1], [0, 0, 1, 1], [], []>} : vector<32x4xbf16>, vector<4x128xbf16>, vector<32x128xf32> -> vector<32x128xf32>
    %c0_13 = arith.constant 0 : index
    %c0_14 = arith.constant 0 : index
    %23 = vector.load %arg6[%c0_13, %c0_14] : memref<8x128xbf16, #tpu.memory_space<vmem>>, vector<8x128xbf16>
    %cst_15 = arith.constant dense<0.000000e+00> : vector<32x128xf32>
    %24 = tpu.matmul %20, %23, %cst_15 {dimension_numbers = #tpu.dot_dimension_numbers<[1], [0], [0], [1], [0, 0, 1, 1], [], []>} : vector<32x8xbf16>, vector<8x128xbf16>, vector<32x128xf32> -> vector<32x128xf32>
    %25 = arith.addf %22, %24 : vector<32x128xf32>
    %26 = vector.shape_cast %25 : vector<32x128xf32> to vector<2x16x128xf32>
    %27 = arith.truncf %9 : vector<2x16x16xf32> to vector<2x16x16xbf16>
    %28 = vector.broadcast %14 : vector<2x16x1xf32> to vector<2x16x128xf32>
    %29 = arith.mulf %28, %26 : vector<2x16x128xf32>
    %30 = arith.truncf %29 : vector<2x16x128xf32> to vector<2x16x128xbf16>
    "tpu.trace_start"() <{level = 10 : i32, message = "bij,bjk->bik"}> : () -> ()
    %cst_16 = arith.constant dense<0.000000e+00> : vector<2x16x128xf32>
    %31 = tpu.matmul %27, %30, %cst_16 {dimension_numbers = #tpu.dot_dimension_numbers<[2], [1], [1], [2], [0, 0, 0, 1, 1, 2], [0], [0]>} : vector<2x16x16xbf16>, vector<2x16x128xbf16>, vector<2x16x128xf32> -> vector<2x16x128xf32>
    "tpu.trace_stop"() : () -> ()
    %32 = vector.broadcast %14 : vector<2x16x1xf32> to vector<2x16x128xf32>
    %33 = arith.mulf %32, %31 : vector<2x16x128xf32>
    %c0_17 = arith.constant 0 : index
    %c0_18 = arith.constant 0 : index
    %34 = vector.load %arg7[%c0_17, %c0_18] : memref<1x128xf32, #tpu.memory_space<vmem>>, vector<1x128xf32>
    %35 = vector.shape_cast %34 : vector<1x128xf32> to vector<1x1x128xf32>
    %36 = vector.broadcast %35 : vector<1x1x128xf32> to vector<2x16x128xf32>
    %37 = arith.addf %33, %36 : vector<2x16x128xf32>
    %38 = vector.extract_strided_slice %37 {offsets = [0, 0, 0], sizes = [2, 16, 8], strides = [1, 1, 1]} : vector<2x16x128xf32> to vector<2x16x8xf32>
    %39 = arith.negf %38 : vector<2x16x8xf32>
    %40 = math.exp %39 : vector<2x16x8xf32>
    %cst_19 = arith.constant 1.000000e+00 : f32
    %41 = vector.broadcast %cst_19 : f32 to vector<2x16x8xf32>
    %42 = arith.addf %41, %40 : vector<2x16x8xf32>
    %43 = arith.divf %41, %42 : vector<2x16x8xf32>
    %44 = vector.extract_strided_slice %37 {offsets = [0, 0, 8], sizes = [2, 16, 8], strides = [1, 1, 1]} : vector<2x16x128xf32> to vector<2x16x8xf32>
    %45 = arith.negf %44 : vector<2x16x8xf32>
    %46 = math.exp %45 : vector<2x16x8xf32>
    %cst_20 = arith.constant 1.000000e+00 : f32
    %47 = vector.broadcast %cst_20 : f32 to vector<2x16x8xf32>
    %48 = arith.addf %47, %46 : vector<2x16x8xf32>
    %49 = arith.divf %47, %48 : vector<2x16x8xf32>
    %50 = vector.extract_strided_slice %37 {offsets = [0, 0, 16], sizes = [2, 16, 8], strides = [1, 1, 1]} : vector<2x16x128xf32> to vector<2x16x8xf32>
    %51 = math.tanh %50 : vector<2x16x8xf32>
    %52 = vector.extract_strided_slice %37 {offsets = [0, 0, 24], sizes = [2, 16, 8], strides = [1, 1, 1]} : vector<2x16x128xf32> to vector<2x16x8xf32>
    %53 = arith.negf %52 : vector<2x16x8xf32>
    %54 = math.exp %53 : vector<2x16x8xf32>
    %cst_21 = arith.constant 1.000000e+00 : f32
    %55 = vector.broadcast %cst_21 : f32 to vector<2x16x8xf32>
    %56 = arith.addf %55, %54 : vector<2x16x8xf32>
    %57 = arith.divf %55, %56 : vector<2x16x8xf32>
    %c0_22 = arith.constant 0 : index
    %c0_23 = arith.constant 0 : index
    %c0_24 = arith.constant 0 : index
    %58 = vector.load %arg4[%c0_22, %c0_23, %c0_24] : memref<2x16x8xf32, #tpu.memory_space<vmem>>, vector<2x16x8xf32>
    %59 = arith.mulf %49, %58 : vector<2x16x8xf32>
    %60 = arith.mulf %43, %51 : vector<2x16x8xf32>
    %61 = arith.addf %59, %60 : vector<2x16x8xf32>
    %62 = math.tanh %61 : vector<2x16x8xf32>
    %63 = arith.mulf %57, %62 : vector<2x16x8xf32>
    %64 = arith.truncf %63 : vector<2x16x8xf32> to vector<2x16x8xbf16>
    %c0_25 = arith.constant 0 : index
    %c0_26 = arith.constant 0 : index
    %c0_27 = arith.constant 0 : index
    %65 = vector.load %arg8[%c0_25, %c0_26, %c0_27] : memref<2x16x8xbf16, #tpu.memory_space<vmem>>, vector<2x16x8xbf16>
    tpu.vector_store %arg8[%c0_25, %c0_26, %c0_27], %64 {strides = array<i32>} : memref<2x16x8xbf16, #tpu.memory_space<vmem>>, vector<2x16x8xbf16>,
    %c0_28 = arith.constant 0 : index
    %c0_29 = arith.constant 0 : index
    %c0_30 = arith.constant 0 : index
    %66 = vector.load %arg9[%c0_28, %c0_29, %c0_30] : memref<2x16x8xf32, #tpu.memory_space<vmem>>, vector<2x16x8xf32>
    tpu.vector_store %arg9[%c0_28, %c0_29, %c0_30], %61 {strides = array<i32>} : memref<2x16x8xf32, #tpu.memory_space<vmem>>, vector<2x16x8xf32>,
    return
  }
  func.func @transform_0(%arg0: i32) -> (i32, i32, i32) {
    %c0_i32 = arith.constant 0 : i32
    %c0_i32_0 = arith.constant 0 : i32
    %c0_i32_1 = arith.constant 0 : i32
    return %arg0, %c0_i32, %c0_i32_0 : i32, i32, i32
  }
  func.func @transform_1(%arg0: i32) -> (i32, i32, i32) {
    %c0_i32 = arith.constant 0 : i32
    %c0_i32_0 = arith.constant 0 : i32
    %c0_i32_1 = arith.constant 0 : i32
    return %arg0, %c0_i32, %c0_i32_0 : i32, i32, i32
  }
  func.func @transform_2(%arg0: i32) -> (i32, i32, i32) {
    %c0_i32 = arith.constant 0 : i32
    %c0_i32_0 = arith.constant 0 : i32
    %c0_i32_1 = arith.constant 0 : i32
    return %arg0, %c0_i32, %c0_i32_0 : i32, i32, i32
  }
  func.func @transform_3(%arg0: i32) -> (i32, i32, i32) {
    %c0_i32 = arith.constant 0 : i32
    %c0_i32_0 = arith.constant 0 : i32
    %c0_i32_1 = arith.constant 0 : i32
    return %arg0, %c0_i32, %c0_i32_0 : i32, i32, i32
  }
  func.func @transform_4(%arg0: i32) -> (i32, i32) {
    %c0_i32 = arith.constant 0 : i32
    %c0_i32_0 = arith.constant 0 : i32
    %c0_i32_1 = arith.constant 0 : i32
    return %c0_i32, %c0_i32_0 : i32, i32
  }
  func.func @transform_5(%arg0: i32) -> (i32, i32) {
    %c0_i32 = arith.constant 0 : i32
    %c0_i32_0 = arith.constant 0 : i32
    %c0_i32_1 = arith.constant 0 : i32
    return %c0_i32, %c0_i32_0 : i32, i32
  }
  func.func @transform_6(%arg0: i32) -> (i32, i32) {
    %c0_i32 = arith.constant 0 : i32
    %c0_i32_0 = arith.constant 0 : i32
    %c0_i32_1 = arith.constant 0 : i32
    return %c0_i32, %c0_i32_0 : i32, i32
  }
  func.func @transform_7(%arg0: i32) -> (i32, i32, i32) {
    %c0_i32 = arith.constant 0 : i32
    %c0_i32_0 = arith.constant 0 : i32
    %c0_i32_1 = arith.constant 0 : i32
    return %arg0, %c0_i32, %c0_i32_0 : i32, i32, i32
  }
  func.func @transform_8(%arg0: i32) -> (i32, i32, i32) {
    %c0_i32 = arith.constant 0 : i32
    %c0_i32_0 = arith.constant 0 : i32
    %c0_i32_1 = arith.constant 0 : i32
    return %arg0, %c0_i32, %c0_i32_0 : i32, i32, i32
  }
}

</mosaic_0001>

<llo_original>
// kernel: gclstm_cell.1
$region0: #{gclstm_cell.1}
  #allocation0 [shape = 'u32[]', space=smem, size = 0x4, offset = 0x4, fixed_abs, tag = 'smem constant byte address 0x4 - core index']
  #allocation1 [shape = 'u32[144,128]{1,0:T(1,128)}', space=vmem, size = 0x12000, scoped, tag = 'internal scratch']
  %s0 = inlined_call_operand.vmem [shape: f32[2,16,4], index: 0, kind: input, shape index: {}]
  %s1 = inlined_call_operand.vmem [shape: f32[2,16,8], index: 1, kind: input, shape index: {}]
  %s2 = inlined_call_operand.vmem [shape: bf16[2,16,16], index: 2, kind: input, shape index: {}]
  %s3 = inlined_call_operand.vmem [shape: f32[2,16,8], index: 3, kind: input, shape index: {}, may-alias: {3,8}]
  %s4 = inlined_call_operand.vmem [shape: bf16[4,128], index: 4, kind: input, shape index: {}]
  %s5 = inlined_call_operand.vmem [shape: bf16[8,128], index: 5, kind: input, shape index: {}]
  %s6 = inlined_call_operand.vmem [shape: f32[1,128], index: 6, kind: input, shape index: {}]
  %s7 = inlined_call_operand.vmem [shape: bf16[2,16,8], index: 7, kind: output, shape index: {0}]
  %s8 = inlined_call_operand.vmem [shape: f32[2,16,8], index: 8, kind: output, shape index: {1}, may-alias: {3,8}]
  %9 = xla_tuple %s7, %s8
  %s10 = sld [smem:[#allocation0]]
  $region46: #{gclstm_cell.1} parent=0
    _
  %s12 = ssub.s32 1, %s10
  %s13 = scalar_select 0, %s12, %s10
  // Predicated region
  $region2: #{gclstm_cell.1} parent=0 // pred_check
    _
  $region3: #{gclstm_cell.1} parent=0 // pred_check_branch
    %15 = sbr.rel (0) target = $region5
  $region4: #{gclstm_cell.1} parent=0 // pred_region
    _
  $region5: #{gclstm_cell.1} parent=0 // pred_fallthru
    _
  // Predicated region
  $region6: #{gclstm_cell.1} parent=0 // pred_check
    _
  $region7: #{gclstm_cell.1} parent=0 // pred_check_branch
    %17 = sbr.rel (0) target = $region9
  $region8: #{gclstm_cell.1} parent=0 // pred_region
    _
  $region9: #{gclstm_cell.1} parent=0 // pred_fallthru
    _
  // Predicated region
  $region10: #{gclstm_cell.1} parent=0 // pred_check
    _
  $region11: #{gclstm_cell.1} parent=0 // pred_check_branch
    %19 = sbr.rel (0) target = $region13
  $region12: #{gclstm_cell.1} parent=0 // pred_region
    _
  $region13: #{gclstm_cell.1} parent=0 // pred_fallthru
    _
  // Predicated region
  $region14: #{gclstm_cell.1} parent=0 // pred_check
    _
  $region15: #{gclstm_cell.1} parent=0 // pred_check_branch
    %21 = sbr.rel (0) target = $region17
  $region16: #{gclstm_cell.1} parent=0 // pred_region
    _
  $region17: #{gclstm_cell.1} parent=0 // pred_fallthru
    _
  // Predicated region
  $region18: #{gclstm_cell.1} parent=0 // pred_check
    _
  $region19: #{gclstm_cell.1} parent=0 // pred_check_branch
    %23 = sbr.rel (0) target = $region21
  $region20: #{gclstm_cell.1} parent=0 // pred_region
    _
  $region21: #{gclstm_cell.1} parent=0 // pred_fallthru
    _
  // Predicated region
  $region22: #{gclstm_cell.1} parent=0 // pred_check
    _
  $region23: #{gclstm_cell.1} parent=0 // pred_check_branch
    %25 = sbr.rel (0) target = $region25
  $region24: #{gclstm_cell.1} parent=0 // pred_region
    _
  $region25: #{gclstm_cell.1} parent=0 // pred_fallthru
    _
  // Predicated region
  $region26: #{gclstm_cell.1} parent=0 // pred_check
    _
  $region27: #{gclstm_cell.1} parent=0 // pred_check_branch
    %27 = sbr.rel (0) target = $region29
  $region28: #{gclstm_cell.1} parent=0 // pred_region
    _
  $region29: #{gclstm_cell.1} parent=0 // pred_fallthru
    _
  %v29 = vlaneseq
  %v30 = vshrl.u32 %v29, 7
  %v31 = vadd.s32 %v30, 8
  %v32 = vlaneseq
  %v33 = vand.u32 %v32, 127
  %vm34 = vcmp.eq.s32.totalorder %v30, %v33
  %vm35 = vcmp.eq.s32.totalorder %v31, %v33
  %v36 = vld [vmem:[%s2] sm:$0xf]
  %v37 = vld [vmem:[%s2 + $0x4] sm:$0xf]
  %v38 = vld [vmem:[%s2 + $0x8] sm:$0xf]
  %v39 = vld [vmem:[%s2 + $0xc] sm:$0xf]
  %v40 = vunpack.c.l.bf16 %v36
  %v41 = vunpack.c.l.bf16 %v37
  %v42 = vunpack.c.l.bf16 %v38
  %v43 = vunpack.c.l.bf16 %v39
  %v44 = vsel %vm34, 1, 0
  %v45 = vsel %vm35, 1, 0
  %vm46 = vcmp.eq.s32.totalorder %v44, 1
  %vm47 = vcmp.eq.s32.totalorder %v45, 1
  %v48 = vsel %vm46, 1.0, %v40
  %v49 = vsel %vm47, 1.0, %v41
  %v50 = vsel %vm46, 1.0, %v42
  %v51 = vsel %vm47, 1.0, %v43
  %vm52 = vcmask 130048
  %v53 = vsel %vm52, %v48, 0.0
  %54 = vadd.xlane.f32.xlu0 %v53
  %v55 = vpop.xlane.xlu0 %54
  %v56 = vsel %vm52, %v49, 0.0
  %57 = vadd.xlane.f32.xlu0 %v56
  %v58 = vpop.xlane.xlu0 %57
  %v59 = vsel %vm52, %v50, 0.0
  %60 = vadd.xlane.f32.xlu0 %v59
  %v61 = vpop.xlane.xlu0 %60
  %v62 = vsel %vm52, %v51, 0.0
  %63 = vadd.xlane.f32.xlu0 %v62
  %v64 = vpop.xlane.xlu0 %63
  %v65 = vmax.f32 %v55, 1.0
  %v66 = vmax.f32 %v58, 1.0
  %v67 = vmax.f32 %v61, 1.0
  %v68 = vmax.f32 %v64, 1.0
  %v69 = vrsqrt.pop %v65
  %v70 = vrsqrt.pop %v66
  %v71 = vrsqrt.pop %v67
  %v72 = vrsqrt.pop %v68
  %v73 = vld [vmem:[%s0] sm:$0xff]
  %v74 = vld [vmem:[%s0 + $0x8] sm:$0xff]
  %v75 = vld [vmem:[%s0 + $0x10] sm:$0xff]
  %v76 = vld [vmem:[%s0 + $0x18] sm:$0xff]
  %v77 = vpack.c.bf16 %v74, %v73
  %v78 = vpack.c.bf16 %v76, %v75
  %v79 = vld [vmem:[%s1] sm:$0xff]
  %v80 = vld [vmem:[%s1 + $0x8] sm:$0xff]
  %v81 = vld [vmem:[%s1 + $0x10] sm:$0xff]
  %v82 = vld [vmem:[%s1 + $0x18] sm:$0xff]
  %v83 = vpack.c.bf16 %v80, %v79
  %v84 = vpack.c.bf16 %v82, %v81
  %v85 = vld [vmem:[%s4] sm:$0x3]
  %v86 = vld [vmem:[%s5] sm:$0xf]
  %vm87 = vcmask 64512
  %v89 = vsel %vm87, %v83, 0
  %v92 = vsel %vm87, %v84, 0
  %vm94 = vcmask 1043456
  %v96 = vsel %vm94, %v86, 0
  %98 = vmatprep.subr.bf16.mxu0 0
  %99 = vmatpush1.bf16.msra.mxu0 0
  %100 = vmatprep.subr.bf16.mxu0 0
  %101 = vmatpush1.bf16.msra.mxu0 0
  %102 = vmatprep.subr.bf16.mxu0 0
  %103 = vmatpush1.bf16.msra.mxu0 0
  %104 = vmatprep.subr.bf16.mxu0 0
  %105 = vmatpush1.bf16.msra.mxu0 0
  %106 = vmatprep.subr.bf16.mxu0 0
  %107 = vmatpush1.bf16.msra.mxu0 0
  %108 = vmatprep.subr.bf16.mxu0 0
  %109 = vmatpush1.bf16.msra.mxu0 0
  %110 = vmatprep.subr.bf16.mxu0 0
  %111 = vmatpush1.bf16.msra.mxu0 0
  %112 = vmatprep.subr.bf16.mxu0 0
  %113 = vmatpush1.bf16.msra.mxu0 %v96
  %114 = vmatprep.subr.bf16.mxu0 0
  %115 = vmatpush2.bf16.msra.mxu0 0
  %116 = vmatprep.subr.bf16.mxu0 0
  %117 = vmatpush2.bf16.msra.mxu0 0
  %118 = vmatprep.subr.bf16.mxu0 0
  %119 = vmatpush2.bf16.msra.mxu0 0
  %120 = vmatprep.subr.bf16.mxu0 0
  %121 = vmatpush2.bf16.msra.mxu0 0
  %122 = vmatprep.subr.bf16.mxu0 0
  %123 = vmatpush2.bf16.msra.mxu0 0
  %124 = vmatprep.subr.bf16.mxu0 0
  %125 = vmatpush2.bf16.msra.mxu0 0
  %126 = vmatprep.subr.bf16.mxu0 0
  %127 = vmatpush2.bf16.msra.mxu0 0
  %128 = vmatprep.subr.bf16.mxu0 0
  %129 = vmatpush2.bf16.msra.mxu0 0
  %130 = vmatprep.mubr.bf16.mxu0 0
  %131 = vmatmul.mubr.bf16.gmra.mxu0 %v89
  %v132 = vpop.f32.mrf.mxu0
  %v133 = vadd.f32 0.0, %v132
  %v134 = vpop.f32.mrf.mxu0
  %v135 = vpop.f32.mrf.mxu0
  %v136 = vadd.f32 0.0, %v135
  %v137 = vpop.f32.mrf.mxu0
  %138 = vmatprep.mubr.bf16.mxu0 0
  %139 = vmatmul.mubr.bf16.gmra.mxu0 %v92
  %v140 = vpop.f32.mrf.mxu0
  %v141 = vadd.f32 0.0, %v140
  %v142 = vpop.f32.mrf.mxu0
  %v143 = vpop.f32.mrf.mxu0
  %v144 = vadd.f32 0.0, %v143
  %v145 = vpop.f32.mrf.mxu0
  %146 = vdwg.mxu0
  %vm147 = vcmask 31744
  %v149 = vsel %vm147, %v77, 0
  %v152 = vsel %vm147, %v78, 0
  %vm154 = vcmask 1041408
  %v156 = vsel %vm154, %v85, 0
  %158 = vmatprep.subr.bf16.mxu0 0
  %159 = vmatpush1.bf16.msra.mxu0 0
  %160 = vmatprep.subr.bf16.mxu0 0
  %161 = vmatpush1.bf16.msra.mxu0 0
  %162 = vmatprep.subr.bf16.mxu0 0
  %163 = vmatpush1.bf16.msra.mxu0 0
  %164 = vmatprep.subr.bf16.mxu0 0
  %165 = vmatpush1.bf16.msra.mxu0 0
  %166 = vmatprep.subr.bf16.mxu0 0
  %167 = vmatpush1.bf16.msra.mxu0 0
  %168 = vmatprep.subr.bf16.mxu0 0
  %169 = vmatpush1.bf16.msra.mxu0 0
  %170 = vmatprep.subr.bf16.mxu0 0
  %171 = vmatpush1.bf16.msra.mxu0 0
  %172 = vmatprep.subr.bf16.mxu0 0
  %173 = vmatpush1.bf16.msra.mxu0 %v156
  %174 = vmatprep.subr.bf16.mxu0 0
  %175 = vmatpush2.bf16.msra.mxu0 0
  %176 = vmatprep.subr.bf16.mxu0 0
  %177 = vmatpush2.bf16.msra.mxu0 0
  %178 = vmatprep.subr.bf16.mxu0 0
  %179 = vmatpush2.bf16.msra.mxu0 0
  %180 = vmatprep.subr.bf16.mxu0 0
  %181 = vmatpush2.bf16.msra.mxu0 0
  %182 = vmatprep.subr.bf16.mxu0 0
  %183 = vmatpush2.bf16.msra.mxu0 0
  %184 = vmatprep.subr.bf16.mxu0 0
  %185 = vmatpush2.bf16.msra.mxu0 0
  %186 = vmatprep.subr.bf16.mxu0 0
  %187 = vmatpush2.bf16.msra.mxu0 0
  %188 = vmatprep.subr.bf16.mxu0 0
  %189 = vmatpush2.bf16.msra.mxu0 0
  %190 = vmatprep.mubr.bf16.mxu0 0
  %191 = vmatmul.mubr.bf16.gmra.mxu0 %v149
  %v192 = vpop.f32.mrf.mxu0
  %v193 = vadd.f32 %v133, %v192
  %v194 = vpop.f32.mrf.mxu0
  %v195 = vpop.f32.mrf.mxu0
  %v196 = vadd.f32 %v136, %v195
  %v197 = vpop.f32.mrf.mxu0
  %198 = vmatprep.mubr.bf16.mxu0 0
  %199 = vmatmul.mubr.bf16.gmra.mxu0 %v152
  %v200 = vpop.f32.mrf.mxu0
  %v201 = vadd.f32 %v141, %v200
  %v202 = vpop.f32.mrf.mxu0
  %v203 = vpop.f32.mrf.mxu0
  %v204 = vadd.f32 %v144, %v203
  %v205 = vpop.f32.mrf.mxu0
  %206 = vdwg.mxu0
  %v207 = vpack.c.bf16 %v49, %v48
  %v208 = vpack.c.bf16 %v51, %v50
  %v209 = vmul.f32 %v69, %v193
  %v210 = vmul.f32 %v70, %v196
  %v211 = vmul.f32 %v71, %v201
  %v212 = vmul.f32 %v72, %v204
  %v213 = vpack.c.bf16 %v210, %v209
  %v214 = vpack.c.bf16 %v212, %v211
  %v216 = vsel %vm52, %v207, 0
  %218 = vmatprep.subr.bf16.mxu0 0
  %219 = vmatpush1.bf16.msra.mxu0 0
  %220 = vmatprep.subr.bf16.mxu0 0
  %221 = vmatpush1.bf16.msra.mxu0 0
  %222 = vmatprep.subr.bf16.mxu0 0
  %223 = vmatpush1.bf16.msra.mxu0 0
  %224 = vmatprep.subr.bf16.mxu0 0
  %225 = vmatpush1.bf16.msra.mxu0 0
  %226 = vmatprep.subr.bf16.mxu0 0
  %227 = vmatpush1.bf16.msra.mxu0 0
  %228 = vmatprep.subr.bf16.mxu0 0
  %229 = vmatpush1.bf16.msra.mxu0 0
  %230 = vmatprep.subr.bf16.mxu0 0
  %231 = vmatpush1.bf16.msra.mxu0 0
  %232 = vmatprep.subr.bf16.mxu0 0
  %233 = vmatpush1.bf16.msra.mxu0 %v213
  %234 = vmatprep.subr.bf16.mxu0 0
  %235 = vmatpush2.bf16.msra.mxu0 0
  %236 = vmatprep.subr.bf16.mxu0 0
  %237 = vmatpush2.bf16.msra.mxu0 0
  %238 = vmatprep.subr.bf16.mxu0 0
  %239 = vmatpush2.bf16.msra.mxu0 0
  %240 = vmatprep.subr.bf16.mxu0 0
  %241 = vmatpush2.bf16.msra.mxu0 0
  %242 = vmatprep.subr.bf16.mxu0 0
  %243 = vmatpush2.bf16.msra.mxu0 0
  %244 = vmatprep.subr.bf16.mxu0 0
  %245 = vmatpush2.bf16.msra.mxu0 0
  %246 = vmatprep.subr.bf16.mxu0 0
  %247 = vmatpush2.bf16.msra.mxu0 0
  %248 = vmatprep.subr.bf16.mxu0 0
  %249 = vmatpush2.bf16.msra.mxu0 0
  %250 = vmatprep.mubr.bf16.mxu0 0
  %251 = vmatmul.mubr.bf16.gmra.mxu0 %v216
  %v252 = vpop.f32.mrf.mxu0
  %v253 = vadd.f32 0.0, %v252
  %v254 = vpop.f32.mrf.mxu0
  %v255 = vpop.f32.mrf.mxu0
  %v256 = vadd.f32 0.0, %v255
  %v257 = vpop.f32.mrf.mxu0
  %258 = vdwg.mxu0
  %v260 = vsel %vm52, %v208, 0
  %262 = vmatprep.subr.bf16.mxu0 0
  %263 = vmatpush1.bf16.msra.mxu0 0
  %264 = vmatprep.subr.bf16.mxu0 0
  %265 = vmatpush1.bf16.msra.mxu0 0
  %266 = vmatprep.subr.bf16.mxu0 0
  %267 = vmatpush1.bf16.msra.mxu0 0
  %268 = vmatprep.subr.bf16.mxu0 0
  %269 = vmatpush1.bf16.msra.mxu0 0
  %270 = vmatprep.subr.bf16.mxu0 0
  %271 = vmatpush1.bf16.msra.mxu0 0
  %272 = vmatprep.subr.bf16.mxu0 0
  %273 = vmatpush1.bf16.msra.mxu0 0
  %274 = vmatprep.subr.bf16.mxu0 0
  %275 = vmatpush1.bf16.msra.mxu0 0
  %276 = vmatprep.subr.bf16.mxu0 0
  %277 = vmatpush1.bf16.msra.mxu0 %v214
  %278 = vmatprep.subr.bf16.mxu0 0
  %279 = vmatpush2.bf16.msra.mxu0 0
  %280 = vmatprep.subr.bf16.mxu0 0
  %281 = vmatpush2.bf16.msra.mxu0 0
  %282 = vmatprep.subr.bf16.mxu0 0
  %283 = vmatpush2.bf16.msra.mxu0 0
  %284 = vmatprep.subr.bf16.mxu0 0
  %285 = vmatpush2.bf16.msra.mxu0 0
  %286 = vmatprep.subr.bf16.mxu0 0
  %287 = vmatpush2.bf16.msra.mxu0 0
  %288 = vmatprep.subr.bf16.mxu0 0
  %289 = vmatpush2.bf16.msra.mxu0 0
  %290 = vmatprep.subr.bf16.mxu0 0
  %291 = vmatpush2.bf16.msra.mxu0 0
  %292 = vmatprep.subr.bf16.mxu0 0
  %293 = vmatpush2.bf16.msra.mxu0 0
  %294 = vmatprep.mubr.bf16.mxu0 0
  %295 = vmatmul.mubr.bf16.gmra.mxu0 %v260
  %v296 = vpop.f32.mrf.mxu0
  %v297 = vadd.f32 0.0, %v296
  %v298 = vpop.f32.mrf.mxu0
  %v299 = vpop.f32.mrf.mxu0
  %v300 = vadd.f32 0.0, %v299
  %v301 = vpop.f32.mrf.mxu0
  %302 = vdwg.mxu0
  %v303 = vmul.f32 %v69, %v253
  %v304 = vmul.f32 %v70, %v256
  %v305 = vmul.f32 %v71, %v297
  %v306 = vmul.f32 %v72, %v300
  %v307 = vld [vmem:[%s6] sm:$0x1]
  %v309 = vlaneseq
  %v310 = vshrl.u32 %v309, 7
  %v311 = vsub.s32 0, %v310
  %v312 = vrot.slane %v307, %v311
  %v314 = vadd.f32 %v303, %v312
  %v315 = vadd.f32 %v304, %v312
  %v316 = vadd.f32 %v305, %v312
  %v317 = vadd.f32 %v306, %v312
  %v318 = vxor.u32 %v314, 2147483648
  %v319 = vxor.u32 %v315, 2147483648
  %v320 = vxor.u32 %v316, 2147483648
  %v321 = vxor.u32 %v317, 2147483648
  %v322 = vmul.f32 %v318, 1.442695
  %v323 = vpow.pop %v322
  %v324 = vmul.f32 %v319, 1.442695
  %v325 = vpow.pop %v324
  %v326 = vmul.f32 %v320, 1.442695
  %v327 = vpow.pop %v326
  %v328 = vmul.f32 %v321, 1.442695
  %v329 = vpow.pop %v328
  %v330 = vadd.f32 %v323, 1.0
  %v331 = vadd.f32 %v325, 1.0
  %v332 = vadd.f32 %v327, 1.0
  %v333 = vadd.f32 %v329, 1.0
  %v334 = vrcp.pop %v330
  %v335 = vmul.f32 1.0, %v334
  %v336 = vrcp.pop %v331
  %v337 = vmul.f32 1.0, %v336
  %v338 = vrcp.pop %v332
  %v339 = vmul.f32 1.0, %v338
  %v340 = vrcp.pop %v333
  %v341 = vmul.f32 1.0, %v340
  %v342 = vtanh.pop %v314
  %v343 = vtanh.pop %v315
  %v344 = vtanh.pop %v316
  %v345 = vtanh.pop %v317
  %v346 = vld [vmem:[%s3] sm:$0xff]
  %v347 = vld [vmem:[%s3 + $0x8] sm:$0xff]
  %v348 = vld [vmem:[%s3 + $0x10] sm:$0xff]
  %v349 = vld [vmem:[%s3 + $0x18] sm:$0xff]
  %354 = vrot.lane.b32.xlu0 %v346, 8
  %v355 = vpop.permute.xlu0 %354
  %356 = vrot.lane.b32.xlu0 %v347, 8
  %v357 = vpop.permute.xlu0 %356
  %358 = vrot.lane.b32.xlu0 %v348, 8
  %v359 = vpop.permute.xlu0 %358
  %360 = vrot.lane.b32.xlu0 %v349, 8
  %v361 = vpop.permute.xlu0 %360
  %v366 = vmul.f32 %v335, %v355
  %v367 = vmul.f32 %v337, %v357
  %v368 = vmul.f32 %v339, %v359
  %v369 = vmul.f32 %v341, %v361
  %374 = vrot.lane.b32.xlu0 %v342, 112
  %v375 = vpop.permute.xlu0 %374
  %376 = vrot.lane.b32.xlu0 %v343, 112
  %v377 = vpop.permute.xlu0 %376
  %378 = vrot.lane.b32.xlu0 %v344, 112
  %v379 = vpop.permute.xlu0 %378
  %380 = vrot.lane.b32.xlu0 %v345, 112
  %v381 = vpop.permute.xlu0 %380
  %v386 = vmul.f32 %v335, %v375
  %v387 = vmul.f32 %v337, %v377
  %v388 = vmul.f32 %v339, %v379
  %v389 = vmul.f32 %v341, %v381
  %394 = vrot.lane.b32.xlu0 %v386, 8
  %v395 = vpop.permute.xlu0 %394
  %396 = vrot.lane.b32.xlu0 %v387, 8
  %v397 = vpop.permute.xlu0 %396
  %398 = vrot.lane.b32.xlu0 %v388, 8
  %v399 = vpop.permute.xlu0 %398
  %400 = vrot.lane.b32.xlu0 %v389, 8
  %v401 = vpop.permute.xlu0 %400
  %v406 = vadd.f32 %v366, %v395
  %v407 = vadd.f32 %v367, %v397
  %v408 = vadd.f32 %v368, %v399
  %v409 = vadd.f32 %v369, %v401
  %v410 = vtanh.pop %v406
  %v411 = vtanh.pop %v407
  %v412 = vtanh.pop %v408
  %v413 = vtanh.pop %v409
  %418 = vrot.lane.b32.xlu0 %v410, 16
  %v419 = vpop.permute.xlu0 %418
  %420 = vrot.lane.b32.xlu0 %v411, 16
  %v421 = vpop.permute.xlu0 %420
  %422 = vrot.lane.b32.xlu0 %v412, 16
  %v423 = vpop.permute.xlu0 %422
  %424 = vrot.lane.b32.xlu0 %v413, 16
  %v425 = vpop.permute.xlu0 %424
  %v430 = vmul.f32 %v335, %v419
  %v431 = vmul.f32 %v337, %v421
  %v432 = vmul.f32 %v339, %v423
  %v433 = vmul.f32 %v341, %v425
  %v434 = vpack.c.bf16 %v431, %v430
  %v435 = vpack.c.bf16 %v433, %v432
  %v438 = vunpack.c.l.b16 %v434
  %v439 = vunpack.c.h.b16 %v434
  %v440 = vunpack.c.l.b16 %v435
  %v441 = vunpack.c.h.b16 %v435
  %v442 = vpack.c.b16 %v438, %v438
  %v443 = vpack.c.b16 %v439, %v439
  %v444 = vpack.c.b16 %v440, %v440
  %v445 = vpack.c.b16 %v441, %v441
  %446 = vrot.lane.b32.xlu0 %v442, 104
  %v447 = vpop.permute.xlu0 %446
  %448 = vrot.lane.b32.xlu0 %v443, 104
  %v449 = vpop.permute.xlu0 %448
  %450 = vrot.lane.b32.xlu0 %v444, 104
  %v451 = vpop.permute.xlu0 %450
  %452 = vrot.lane.b32.xlu0 %v445, 104
  %v453 = vpop.permute.xlu0 %452
  %vm458 = vcmask 60416
  %459 = vst.msk [vmem:[%s7] sm:$0xf] %vm458, %v447
  %460 = vst.msk [vmem:[%s7 + $0x4] sm:$0xf] %vm458, %v449
  %461 = vst.msk [vmem:[%s7 + $0x8] sm:$0xf] %vm458, %v451
  %462 = vst.msk [vmem:[%s7 + $0xc] sm:$0xf] %vm458, %v453
  %467 = vrot.lane.b32.xlu0 %v406, 120
  %v468 = vpop.permute.xlu0 %467
  %469 = vrot.lane.b32.xlu0 %v407, 120
  %v470 = vpop.permute.xlu0 %469
  %471 = vrot.lane.b32.xlu0 %v408, 120
  %v472 = vpop.permute.xlu0 %471
  %473 = vrot.lane.b32.xlu0 %v409, 120
  %v474 = vpop.permute.xlu0 %473
  %479 = vst.msk [vmem:[%s8] sm:$0xff] %vm87, %v468
  %480 = vst.msk [vmem:[%s8 + $0x8] sm:$0xff] %vm87, %v470
  %481 = vst.msk [vmem:[%s8 + $0x10] sm:$0xff] %vm87, %v472
  %482 = vst.msk [vmem:[%s8 + $0x18] sm:$0xff] %vm87, %v474
  // Predicated region
  $region30: #{gclstm_cell.1} parent=0 // pred_check
    _
  $region31: #{gclstm_cell.1} parent=0 // pred_check_branch
    %484 = sbr.rel (0) target = $region33
  $region32: #{gclstm_cell.1} parent=0 // pred_region
    _
  $region33: #{gclstm_cell.1} parent=0 // pred_fallthru
    _
  // Predicated region
  $region34: #{gclstm_cell.1} parent=0 // pred_check
    _
  $region35: #{gclstm_cell.1} parent=0 // pred_check_branch
    %486 = sbr.rel (0) target = $region37
  $region36: #{gclstm_cell.1} parent=0 // pred_region
    _
  $region37: #{gclstm_cell.1} parent=0 // pred_fallthru
    _
  // Predicated region
  $region38: #{gclstm_cell.1} parent=0 // pred_check
    _
  $region39: #{gclstm_cell.1} parent=0 // pred_check_branch
    %488 = sbr.rel (0) target = $region41
  $region40: #{gclstm_cell.1} parent=0 // pred_region
    _
  $region41: #{gclstm_cell.1} parent=0 // pred_fallthru
    _
  // Predicated region
  $region42: #{gclstm_cell.1} parent=0 // pred_check
    _
  $region43: #{gclstm_cell.1} parent=0 // pred_check_branch
    %490 = sbr.rel (0) target = $region45
  $region44: #{gclstm_cell.1} parent=0 // pred_region
    _
  $region45: #{gclstm_cell.1} parent=0 // pred_fallthru
    _

</llo_original>
